<compile_context>
chip_gen: v5e
topology: v5e:2x2
jax: 0.10.0
libtpu: 0.0.40
codegen_flags: <defaults>
</compile_context>

<pallas_src>
import jax
import jax.numpy as jnp
from jax.experimental import pallas as pl
from jax.experimental.pallas import tpu as pltpu

N_HOSTS = 16
N_FEATS = 3 * N_HOSTS                            # 48
N_WINDOW = 1
N_LATENT = N_FEATS                               # 48
N_HIDDEN = 16
N_IN = N_WINDOW * N_FEATS + N_HOSTS * N_HOSTS    # 304
PROTO_DIM = 8                                    # external constant in DeepFT source
N_HEAD = 3 + PROTO_DIM                           # 11 merged outputs per host
N_OUT = N_HOSTS * N_HEAD                         # 176
N_OUT_PAD = 256                                  # lane-dense (multiple of 128)


def deepft_fused_kernel(x_ref, w_ref, b_ref, y_ref):
    # Single GEMM + bias + sigmoid.  All pre-sigmoid activations in the
    # original module are identity (LeakyReLU(True) -> slope 1.0), so the
    # whole chain was folded into (w_ref, b_ref) by the wrapper.
    y = jnp.dot(x_ref[...], w_ref[...], preferred_element_type=jnp.float32)
    y_ref[...] = jax.nn.sigmoid(y + b_ref[...])


def make_linear(key, fan_in, fan_out):
    # deterministic PyTorch-like init: U(-1/sqrt(fan_in), 1/sqrt(fan_in)),
    # stored (in_features, out_features) so y = x @ W + b.
    kw, kb = jax.random.split(key)
    bound = 1.0 / (fan_in ** 0.5)
    W = jax.random.uniform(kw, (fan_in, fan_out), jnp.float32, -bound, bound)
    b = jax.random.uniform(kb, (fan_out,), jnp.float32, -bound, bound)
    return W, b


def make_params(key):
    keys = jax.random.split(key, 6)
    return {
        'enc': make_linear(keys[0], N_IN, N_HOSTS * N_LATENT),
        's1': make_linear(keys[1], N_LATENT, N_HIDDEN),
        's2': make_linear(keys[2], N_HIDDEN, 3),
        'p1': make_linear(keys[3], N_LATENT, N_HIDDEN),
        'p2': make_linear(keys[4], N_HIDDEN, N_HIDDEN),
        'p3': make_linear(keys[5], N_HIDDEN, PROTO_DIM),
    }


def fold_params(params):
    """One-time pre-fold of the identity-activation affine chain.

    states[h] = sigmoid(z[h] @ Ws1 @ Ws2 + bs1 @ Ws2 + bs2)
    protos[h] = sigmoid(z[h] @ Wp1 @ Wp2 @ Wp3 + bp1 @ Wp2 @ Wp3 + bp2 @ Wp3 + bp3)
    z[h]      = x @ We[:, h*48:(h+1)*48] + be[h*48:(h+1)*48]
    =>  out[h, j] = sigmoid(x @ A[:, h*11 + j] + b[h*11 + j])
    """
    We, be = params['enc']
    Ws1, bs1 = params['s1']
    Ws2, bs2 = params['s2']
    Wp1, bp1 = params['p1']
    Wp2, bp2 = params['p2']
    Wp3, bp3 = params['p3']

    Ws = Ws1 @ Ws2                                        # (48, 3)
    bs = bs1 @ Ws2 + bs2                                  # (3,)
    Wp = Wp1 @ Wp2 @ Wp3                                  # (48, 8)
    bp = bp1 @ Wp2 @ Wp3 + bp2 @ Wp3 + bp3                # (8,)
    Whead = jnp.concatenate([Ws, Wp], axis=1)             # (48, 11)
    bhead = jnp.concatenate([bs, bp])                     # (11,)

    We3 = We.reshape(N_IN, N_HOSTS, N_LATENT)             # (304, 16, 48)
    A = jnp.einsum('khd,dj->khj', We3, Whead).reshape(N_IN, N_OUT)       # (304, 176)
    bvec = (be.reshape(N_HOSTS, N_LATENT) @ Whead + bhead).reshape(1, N_OUT)

    # zero-pad to 256 lanes for an unmasked, lane-dense output store
    A_pad = jnp.zeros((N_IN, N_OUT_PAD), jnp.float32).at[:, :N_OUT].set(A)
    b_pad = jnp.zeros((1, N_OUT_PAD), jnp.float32).at[:, :N_OUT].set(bvec)
    return A_pad, b_pad


def deepft_forward(t, s, folded):
    A_pad, b_pad = folded
    # glue: flatten/concat inputs exactly as torch.cat((t.view(-1), s.view(-1)))
    x = jnp.concatenate([t.reshape(-1), s.reshape(-1)]).reshape(1, N_IN).astype(jnp.float32)

    vmem = pl.BlockSpec(memory_space=pltpu.MemorySpace.VMEM)
    y = pl.pallas_call(
        deepft_fused_kernel,
        out_shape=jax.ShapeDtypeStruct((1, N_OUT_PAD), jnp.float32),
        in_specs=[vmem, vmem, vmem],
        out_specs=vmem,
        cost_estimate=pl.CostEstimate(
            flops=2 * N_IN * N_OUT_PAD,
            transcendentals=N_OUT_PAD,
            bytes_accessed=(N_IN * N_OUT_PAD + N_IN + 2 * N_OUT_PAD) * 4),
    )(x, A_pad, b_pad)

    out = y[0, :N_OUT].reshape(N_HOSTS, N_HEAD)
    states = out[:, :3]                                   # (16, 3)
    protos = out[:, 3:]                                    # (16, PROTO_DIM)
    return states, protos


def reference_forward(t, s, params):
    # un-folded pure-JAX reference matching the PyTorch module semantics
    x = jnp.concatenate([t.reshape(-1), s.reshape(-1)]).astype(jnp.float32)
    We, be = params['enc']
    z = (x @ We + be).reshape(N_HOSTS, N_LATENT)          # LeakyReLU(slope=1) == id
    Ws1, bs1 = params['s1']
    Ws2, bs2 = params['s2']
    states = jax.nn.sigmoid((z @ Ws1 + bs1) @ Ws2 + bs2)
    Wp1, bp1 = params['p1']
    Wp2, bp2 = params['p2']
    Wp3, bp3 = params['p3']
    protos = jax.nn.sigmoid(((z @ Wp1 + bp1) @ Wp2 + bp2) @ Wp3 + bp3)
    return states, protos


if __name__ == "__main__":
    key = jax.random.PRNGKey(0)
    k_t, k_s, k_p = jax.random.split(key, 3)

    # inputs: t = (n_window, n_feats) host metrics, s = (n_hosts, n_hosts) schedule
    t = jax.random.uniform(k_t, (N_WINDOW, N_FEATS), jnp.float32)
    s = jax.random.uniform(k_s, (N_HOSTS, N_HOSTS), jnp.float32)
    params = make_params(k_p)

    folded = fold_params(params)
    states, protos = deepft_forward(t, s, folded)
    jax.block_until_ready((states, protos))

    ref_states, ref_protos = reference_forward(t, s, params)
    assert states.shape == (N_HOSTS, 3)
    assert protos.shape == (N_HOSTS, PROTO_DIM)
    # folding the affine chain reassociates FP ops -> slightly looser tolerance
    assert jnp.allclose(states, ref_states, atol=1e-4, rtol=1e-4)
    assert jnp.allclose(protos, ref_protos, atol=1e-4, rtol=1e-4)

    print("KERNEL_OK")
</pallas_src>

<mosaic_0001>
module attributes {stable_mosaic.version = 11 : i64} {
  func.func @deepft_fused_kernel(%arg0: memref<1x304xf32, #tpu.memory_space<vmem>>, %arg1: memref<304x256xf32, #tpu.memory_space<vmem>>, %arg2: memref<1x256xf32, #tpu.memory_space<vmem>>, %arg3: memref<1x256xf32, #tpu.memory_space<vmem>>) attributes {dimension_semantics = [], scalar_prefetch = 0 : i64, scratch_operands = 0 : i64, tpu.core_type = #tpu.core_type<tc>} {
    %c0 = arith.constant 0 : index
    %c0_0 = arith.constant 0 : index
    %0 = vector.load %arg0[%c0, %c0_0] : memref<1x304xf32, #tpu.memory_space<vmem>>, vector<1x304xf32>
    %c0_1 = arith.constant 0 : index
    %c0_2 = arith.constant 0 : index
    %1 = vector.load %arg1[%c0_1, %c0_2] : memref<304x256xf32, #tpu.memory_space<vmem>>, vector<304x256xf32>
    %cst = arith.constant dense<0.000000e+00> : vector<1x256xf32>
    %2 = tpu.matmul %0, %1, %cst {dimension_numbers = #tpu.dot_dimension_numbers<[1], [0], [0], [1], [0, 0, 1, 1], [], []>} : vector<1x304xf32>, vector<304x256xf32>, vector<1x256xf32> -> vector<1x256xf32>
    %c0_3 = arith.constant 0 : index
    %c0_4 = arith.constant 0 : index
    %3 = vector.load %arg2[%c0_3, %c0_4] : memref<1x256xf32, #tpu.memory_space<vmem>>, vector<1x256xf32>
    %4 = arith.addf %2, %3 : vector<1x256xf32>
    %5 = arith.negf %4 : vector<1x256xf32>
    %6 = math.exp %5 : vector<1x256xf32>
    %cst_5 = arith.constant 1.000000e+00 : f32
    %7 = vector.broadcast %cst_5 : f32 to vector<1x256xf32>
    %8 = arith.addf %7, %6 : vector<1x256xf32>
    %9 = arith.divf %7, %8 : vector<1x256xf32>
    %c0_6 = arith.constant 0 : index
    %c0_7 = arith.constant 0 : index
    %10 = vector.load %arg3[%c0_6, %c0_7] : memref<1x256xf32, #tpu.memory_space<vmem>>, vector<1x256xf32>
    tpu.vector_store %arg3[%c0_6, %c0_7], %9 {strides = array<i32>} : memref<1x256xf32, #tpu.memory_space<vmem>>, vector<1x256xf32>,
    return
  }
}

</mosaic_0001>

<llo_original>
// kernel: tpu_custom_call.1
$region0: #{tpu_custom_call.1}
  #allocation0 [shape = 'u32[]', space=smem, size = 0x4, offset = 0x4, fixed_abs, tag = 'smem constant byte address 0x4 - core index']
  #allocation1 [shape = 'u32[72,128]{1,0:T(1,128)}', space=vmem, size = 0x9000, scoped, tag = 'internal scratch']
  %s0 = inlined_call_operand.hbm [shape: f32[1,304], index: 0, kind: input, shape index: {}]
  %s1 = inlined_call_operand.hbm [shape: f32[304,256], index: 1, kind: input, shape index: {}]
  %s2 = inlined_call_operand.hbm [shape: f32[1,256], index: 2, kind: input, shape index: {}]
  %s3 = inlined_call_operand.hbm [shape: f32[1,256], index: 3, kind: output, shape index: {}]
  %s4 = sld [smem:[#allocation0]]
  $region34: #{tpu_custom_call.1} parent=0
    _
  %s6 = ssub.s32 1, %s4
  %s7 = scalar_select 0, %s6, %s4
  $region1: #{tpu_custom_call.1} parent=0
    #allocation2 [shape = 'u8[1536]{0}', space=vmem, size = 0x800, scoped, tag = 'input window, operand 0, single buffered']
    #allocation3 [shape = 's32[1]{0}', space=sflag, size = 0x4, scoped, tag = 'scoped memory for tpu_custom_call.1']
    #allocation4 [shape = 's32[1]{0}', space=sflag, size = 0x4, scoped, tag = 'scoped memory for tpu_custom_call.1']
    #allocation5 [shape = 'u8[311296]{0}', space=vmem, size = 0x4c000, scoped, tag = 'input window, operand 1, single buffered']
    #allocation6 [shape = 's32[1]{0}', space=sflag, size = 0x4, scoped, tag = 'scoped memory for tpu_custom_call.1']
    #allocation7 [shape = 'u8[1024]{0}', space=vmem, size = 0x400, scoped, tag = 'input window, operand 2, single buffered']
    #allocation8 [shape = 'u8[1024]{0}', space=vmem, size = 0x400, scoped, tag = 'output window, operand 0, single buffered']
    %8 = vsyncpa [#allocation3], 0
    %9 = vsyncpa [#allocation6], 0
    %10 = vsyncpa [#allocation4], 0
    // Predicated region
    $region2: #{tpu_custom_call.1} parent=1 // pred_check
      _
    $region3: #{tpu_custom_call.1} parent=1 // pred_check_branch
      %12 = sbr.rel (0) target = $region5
    $region4: #{tpu_custom_call.1} parent=1 // pred_region
      %14 = vsyncadd [#allocation3], 0
      %s16 = sshll.u32 %s0, 4
      %s17 = int_to_ptr.hbm [resolvable:$true] %s16
      %s18 = sshll.u32 [#allocation2], 4
      %s19 = int_to_ptr.vmem [resolvable:$true] %s18
      %21 = dma.hbm_to_vmem [thread:$0]  %s17, 48, %s19, [#allocation3]
    $region5: #{tpu_custom_call.1} parent=1 // pred_fallthru
      _
    // Predicated region
    $region6: #{tpu_custom_call.1} parent=1 // pred_check
      _
    $region7: #{tpu_custom_call.1} parent=1 // pred_check_branch
      %23 = sbr.rel (0) target = $region9
    $region8: #{tpu_custom_call.1} parent=1 // pred_region
      %25 = vsyncadd [#allocation6], 0
      %s26 = sshll.u32 %s1, 4
      %s27 = int_to_ptr.hbm [resolvable:$true] %s26
      %s28 = sshll.u32 [#allocation5], 4
      %s29 = int_to_ptr.vmem [resolvable:$true] %s28
      %34 = dma.hbm_to_vmem [thread:$0]  %s27, 9728, %s29, [#allocation6], 256, 256, 16
    $region9: #{tpu_custom_call.1} parent=1 // pred_fallthru
      _
    // Predicated region
    $region10: #{tpu_custom_call.1} parent=1 // pred_check
      _
    $region11: #{tpu_custom_call.1} parent=1 // pred_check_branch
      %36 = sbr.rel (0) target = $region13
    $region12: #{tpu_custom_call.1} parent=1 // pred_region
      %38 = vsyncadd [#allocation6], 0
      %s40 = sshll.u32 %s2, 4
      %s41 = int_to_ptr.hbm [resolvable:$true] %s40
      %s42 = sshll.u32 [#allocation7], 4
      %s43 = int_to_ptr.vmem [resolvable:$true] %s42
      %45 = dma.hbm_to_vmem [thread:$0]  %s41, 32, %s43, [#allocation6]
    $region13: #{tpu_custom_call.1} parent=1 // pred_fallthru
      _
    // Predicated region
    $region14: #{tpu_custom_call.1} parent=1 // pred_check
      _
    $region15: #{tpu_custom_call.1} parent=1 // pred_check_branch
      %47 = sbr.rel (0) target = $region17
    $region16: #{tpu_custom_call.1} parent=1 // pred_region
      %49 = dma.done [#allocation3], 48
    $region17: #{tpu_custom_call.1} parent=1 // pred_fallthru
      _
    // Predicated region
    $region18: #{tpu_custom_call.1} parent=1 // pred_check
      _
    $region19: #{tpu_custom_call.1} parent=1 // pred_check_branch
      %51 = sbr.rel (0) target = $region21
    $region20: #{tpu_custom_call.1} parent=1 // pred_region
      %53 = dma.done [#allocation6], 9728
    $region21: #{tpu_custom_call.1} parent=1 // pred_fallthru
      _
    // Predicated region
    $region22: #{tpu_custom_call.1} parent=1 // pred_check
      _
    $region23: #{tpu_custom_call.1} parent=1 // pred_check_branch
      %55 = sbr.rel (0) target = $region25
    $region24: #{tpu_custom_call.1} parent=1 // pred_region
      %57 = dma.done [#allocation6], 32
    $region25: #{tpu_custom_call.1} parent=1 // pred_fallthru
      _
    %v58 = vld [vmem:[#allocation2] sm:$0x7]
    %v59 = vld [vmem:[#allocation5] sm:$0xff]
    %v60 = vld [vmem:[#allocation5 + $0x8] sm:$0xff]
    %v61 = vld [vmem:[#allocation5 + $0x10] sm:$0xff]
    %v62 = vld [vmem:[#allocation5 + $0x18] sm:$0xff]
    %v63 = vld [vmem:[#allocation5 + $0x20] sm:$0xff]
    %v64 = vld [vmem:[#allocation5 + $0x28] sm:$0xff]
    %v65 = vld [vmem:[#allocation5 + $0x30] sm:$0xff]
    %v66 = vld [vmem:[#allocation5 + $0x38] sm:$0xff]
    %v67 = vld [vmem:[#allocation5 + $0x40] sm:$0xff]
    %v68 = vld [vmem:[#allocation5 + $0x48] sm:$0xff]
    %v69 = vld [vmem:[#allocation5 + $0x50] sm:$0xff]
    %v70 = vld [vmem:[#allocation5 + $0x58] sm:$0xff]
    %v71 = vld [vmem:[#allocation5 + $0x60] sm:$0xff]
    %v72 = vld [vmem:[#allocation5 + $0x68] sm:$0xff]
    %v73 = vld [vmem:[#allocation5 + $0x70] sm:$0xff]
    %v74 = vld [vmem:[#allocation5 + $0x78] sm:$0xff]
    %v75 = vld [vmem:[#allocation5 + $0x80] sm:$0xff]
    %v76 = vld [vmem:[#allocation5 + $0x88] sm:$0xff]
    %v77 = vld [vmem:[#allocation5 + $0x90] sm:$0xff]
    %v78 = vld [vmem:[#allocation5 + $0x98] sm:$0xff]
    %v79 = vld [vmem:[#allocation5 + $0xa0] sm:$0xff]
    %v80 = vld [vmem:[#allocation5 + $0xa8] sm:$0xff]
    %v81 = vld [vmem:[#allocation5 + $0xb0] sm:$0xff]
    %v82 = vld [vmem:[#allocation5 + $0xb8] sm:$0xff]
    %v83 = vld [vmem:[#allocation5 + $0xc0] sm:$0xff]
    %v84 = vld [vmem:[#allocation5 + $0xc8] sm:$0xff]
    %v85 = vld [vmem:[#allocation5 + $0xd0] sm:$0xff]
    %v86 = vld [vmem:[#allocation5 + $0xd8] sm:$0xff]
    %v87 = vld [vmem:[#allocation5 + $0xe0] sm:$0xff]
    %v88 = vld [vmem:[#allocation5 + $0xe8] sm:$0xff]
    %v89 = vld [vmem:[#allocation5 + $0xf0] sm:$0xff]
    %v90 = vld [vmem:[#allocation5 + $0xf8] sm:$0xff]
    %v91 = vld [vmem:[#allocation5 + $0x100] sm:$0xff]
    %v92 = vld [vmem:[#allocation5 + $0x108] sm:$0xff]
    %v93 = vld [vmem:[#allocation5 + $0x110] sm:$0xff]
    %v94 = vld [vmem:[#allocation5 + $0x118] sm:$0xff]
    %v95 = vld [vmem:[#allocation5 + $0x120] sm:$0xff]
    %v96 = vld [vmem:[#allocation5 + $0x128] sm:$0xff]
    %v97 = vld [vmem:[#allocation5 + $0x130] sm:$0xff]
    %v98 = vld [vmem:[#allocation5 + $0x138] sm:$0xff]
    %v99 = vld [vmem:[#allocation5 + $0x140] sm:$0xff]
    %v100 = vld [vmem:[#allocation5 + $0x148] sm:$0xff]
    %v101 = vld [vmem:[#allocation5 + $0x150] sm:$0xff]
    %v102 = vld [vmem:[#allocation5 + $0x158] sm:$0xff]
    %v103 = vld [vmem:[#allocation5 + $0x160] sm:$0xff]
    %v104 = vld [vmem:[#allocation5 + $0x168] sm:$0xff]
    %v105 = vld [vmem:[#allocation5 + $0x170] sm:$0xff]
    %v106 = vld [vmem:[#allocation5 + $0x178] sm:$0xff]
    %v107 = vld [vmem:[#allocation5 + $0x180] sm:$0xff]
    %v108 = vld [vmem:[#allocation5 + $0x188] sm:$0xff]
    %v109 = vld [vmem:[#allocation5 + $0x190] sm:$0xff]
    %v110 = vld [vmem:[#allocation5 + $0x198] sm:$0xff]
    %v111 = vld [vmem:[#allocation5 + $0x1a0] sm:$0xff]
    %v112 = vld [vmem:[#allocation5 + $0x1a8] sm:$0xff]
    %v113 = vld [vmem:[#allocation5 + $0x1b0] sm:$0xff]
    %v114 = vld [vmem:[#allocation5 + $0x1b8] sm:$0xff]
    %v115 = vld [vmem:[#allocation5 + $0x1c0] sm:$0xff]
    %v116 = vld [vmem:[#allocation5 + $0x1c8] sm:$0xff]
    %v117 = vld [vmem:[#allocation5 + $0x1d0] sm:$0xff]
    %v118 = vld [vmem:[#allocation5 + $0x1d8] sm:$0xff]
    %v119 = vld [vmem:[#allocation5 + $0x1e0] sm:$0xff]
    %v120 = vld [vmem:[#allocation5 + $0x1e8] sm:$0xff]
    %v121 = vld [vmem:[#allocation5 + $0x1f0] sm:$0xff]
    %v122 = vld [vmem:[#allocation5 + $0x1f8] sm:$0xff]
    %v123 = vld [vmem:[#allocation5 + $0x200] sm:$0xff]
    %v124 = vld [vmem:[#allocation5 + $0x208] sm:$0xff]
    %v125 = vld [vmem:[#allocation5 + $0x210] sm:$0xff]
    %v126 = vld [vmem:[#allocation5 + $0x218] sm:$0xff]
    %v127 = vld [vmem:[#allocation5 + $0x220] sm:$0xff]
    %v128 = vld [vmem:[#allocation5 + $0x228] sm:$0xff]
    %v129 = vld [vmem:[#allocation5 + $0x230] sm:$0xff]
    %v130 = vld [vmem:[#allocation5 + $0x238] sm:$0xff]
    %v131 = vld [vmem:[#allocation5 + $0x240] sm:$0xff]
    %v132 = vld [vmem:[#allocation5 + $0x248] sm:$0xff]
    %v133 = vld [vmem:[#allocation5 + $0x250] sm:$0xff]
    %v134 = vld [vmem:[#allocation5 + $0x258] sm:$0xff]
    %v135 = vld [vmem:[#allocation7] sm:$0x3]
    %v137 = vperm.slane %v58, 0
    %v138 = vperm.slane %v58, 1
    %v139 = vperm.slane %v58, 2
    %v143 = vperm.slane %v135, 0
    %v144 = vperm.slane %v135, 1
    %vm147 = vcmask 392192
    %v148 = vsel %vm147, %v139, 0
    %150 = vmatpush.msra.mxu0 %v89
    %151 = vmatpush.msra.mxu0 %v87
    %152 = vmatpush.msra.mxu0 %v85
    %153 = vmatpush.msra.mxu0 %v83
    %154 = vmatpush.msra.mxu0 %v81
    %155 = vmatpush.msra.mxu0 %v79
    %156 = vmatpush.msra.mxu0 %v77
    %157 = vmatpush.msra.mxu0 %v75
    %158 = vmatpush.msra.mxu0 %v73
    %159 = vmatpush.msra.mxu0 %v71
    %160 = vmatpush.msra.mxu0 %v69
    %161 = vmatpush.msra.mxu0 %v67
    %162 = vmatpush.msra.mxu0 %v65
    %163 = vmatpush.msra.mxu0 %v63
    %164 = vmatpush.msra.mxu0 %v61
    %165 = vmatpush.msra.mxu0 %v59
    %166 = vmatmul.f32.gmra.mxu0 %v137
    %v167 = vpop.f32.mrf.mxu0
    %v168 = vadd.f32 %v143, %v167
    %169 = vdwg.mxu0
    %170 = vmatpush.msra.mxu0 %v121
    %171 = vmatpush.msra.mxu0 %v119
    %172 = vmatpush.msra.mxu0 %v117
    %173 = vmatpush.msra.mxu0 %v115
    %174 = vmatpush.msra.mxu0 %v113
    %175 = vmatpush.msra.mxu0 %v111
    %176 = vmatpush.msra.mxu0 %v109
    %177 = vmatpush.msra.mxu0 %v107
    %178 = vmatpush.msra.mxu0 %v105
    %179 = vmatpush.msra.mxu0 %v103
    %180 = vmatpush.msra.mxu0 %v101
    %181 = vmatpush.msra.mxu0 %v99
    %182 = vmatpush.msra.mxu0 %v97
    %183 = vmatpush.msra.mxu0 %v95
    %184 = vmatpush.msra.mxu0 %v93
    %185 = vmatpush.msra.mxu0 %v91
    %186 = vmatmul.f32.gmra.mxu0 %v138
    %v187 = vpop.f32.mrf.mxu0
    %v188 = vadd.f32 %v168, %v187
    %189 = vdwg.mxu0
    %190 = vmatpush.msra.mxu0 0.0
    %191 = vmatpush.msra.mxu0 0.0
    %192 = vmatpush.msra.mxu0 0.0
    %193 = vmatpush.msra.mxu0 0.0
    %194 = vmatpush.msra.mxu0 0.0
    %195 = vmatpush.msra.mxu0 0.0
    %196 = vmatpush.msra.mxu0 0.0
    %197 = vmatpush.msra.mxu0 0.0
    %198 = vmatpush.msra.mxu0 0.0
    %199 = vmatpush.msra.mxu0 0.0
    %200 = vmatpush.msra.mxu0 %v133
    %201 = vmatpush.msra.mxu0 %v131
    %202 = vmatpush.msra.mxu0 %v129
    %203 = vmatpush.msra.mxu0 %v127
    %204 = vmatpush.msra.mxu0 %v125
    %205 = vmatpush.msra.mxu0 %v123
    %206 = vmatmul.f32.gmra.mxu0 %v148
    %v207 = vpop.f32.mrf.mxu0
    %v208 = vadd.f32 %v188, %v207
    %209 = vdwg.mxu0
    %210 = vmatpush.msra.mxu0 %v90
    %211 = vmatpush.msra.mxu0 %v88
    %212 = vmatpush.msra.mxu0 %v86
    %213 = vmatpush.msra.mxu0 %v84
    %214 = vmatpush.msra.mxu0 %v82
    %215 = vmatpush.msra.mxu0 %v80
    %216 = vmatpush.msra.mxu0 %v78
    %217 = vmatpush.msra.mxu0 %v76
    %218 = vmatpush.msra.mxu0 %v74
    %219 = vmatpush.msra.mxu0 %v72
    %220 = vmatpush.msra.mxu0 %v70
    %221 = vmatpush.msra.mxu0 %v68
    %222 = vmatpush.msra.mxu0 %v66
    %223 = vmatpush.msra.mxu0 %v64
    %224 = vmatpush.msra.mxu0 %v62
    %225 = vmatpush.msra.mxu0 %v60
    %226 = vmatmul.f32.gmra.mxu0 %v137
    %v227 = vpop.f32.mrf.mxu0
    %v228 = vadd.f32 %v144, %v227
    %229 = vdwg.mxu0
    %230 = vmatpush.msra.mxu0 %v122
    %231 = vmatpush.msra.mxu0 %v120
    %232 = vmatpush.msra.mxu0 %v118
    %233 = vmatpush.msra.mxu0 %v116
    %234 = vmatpush.msra.mxu0 %v114
    %235 = vmatpush.msra.mxu0 %v112
    %236 = vmatpush.msra.mxu0 %v110
    %237 = vmatpush.msra.mxu0 %v108
    %238 = vmatpush.msra.mxu0 %v106
    %239 = vmatpush.msra.mxu0 %v104
    %240 = vmatpush.msra.mxu0 %v102
    %241 = vmatpush.msra.mxu0 %v100
    %242 = vmatpush.msra.mxu0 %v98
    %243 = vmatpush.msra.mxu0 %v96
    %244 = vmatpush.msra.mxu0 %v94
    %245 = vmatpush.msra.mxu0 %v92
    %246 = vmatmul.f32.gmra.mxu0 %v138
    %v247 = vpop.f32.mrf.mxu0
    %v248 = vadd.f32 %v228, %v247
    %249 = vdwg.mxu0
    %250 = vmatpush.msra.mxu0 0.0
    %251 = vmatpush.msra.mxu0 0.0
    %252 = vmatpush.msra.mxu0 0.0
    %253 = vmatpush.msra.mxu0 0.0
    %254 = vmatpush.msra.mxu0 0.0
    %255 = vmatpush.msra.mxu0 0.0
    %256 = vmatpush.msra.mxu0 0.0
    %257 = vmatpush.msra.mxu0 0.0
    %258 = vmatpush.msra.mxu0 0.0
    %259 = vmatpush.msra.mxu0 0.0
    %260 = vmatpush.msra.mxu0 %v134
    %261 = vmatpush.msra.mxu0 %v132
    %262 = vmatpush.msra.mxu0 %v130
    %263 = vmatpush.msra.mxu0 %v128
    %264 = vmatpush.msra.mxu0 %v126
    %265 = vmatpush.msra.mxu0 %v124
    %266 = vmatmul.f32.gmra.mxu0 %v148
    %v267 = vpop.f32.mrf.mxu0
    %v268 = vadd.f32 %v248, %v267
    %269 = vdwg.mxu0
    %v270 = vxor.u32 %v208, 2147483648
    %v271 = vxor.u32 %v268, 2147483648
    %v272 = vmul.f32 %v270, 1.442695
    %v273 = vpow.pop %v272
    %v274 = vmul.f32 %v271, 1.442695
    %v275 = vpow.pop %v274
    %v276 = vadd.f32 %v273, 1.0
    %v277 = vadd.f32 %v275, 1.0
    %v278 = vrcp.pop %v276
    %v279 = vmul.f32 %v276, %v278
    %v280 = vsub.f32 1.0, %v279
    %v281 = vmul.f32 %v278, %v280
    %v282 = vadd.f32 %v278, %v281
    %vm283 = vweird.f32 %v276
    %vm284 = vweird.f32 %v278
    %vm285 = vmor %vm283, %vm284
    %v286 = vsel %vm285, %v278, %v282
    %v287 = vand.u32 2147483647, %v276
    %vm288 = vcmp.eq.f32.partialorder %v287, 8.507059e+37
    %v289 = vand.u32 %v276, 2147483648
    %v290 = vor.u32 1.1754944e-38, %v289
    %v291 = vsel %vm288, %v290, %v286
    %v292 = vmul.f32 1.0, %v291
    %v293 = vrcp.pop %v277
    %v294 = vmul.f32 %v277, %v293
    %v295 = vsub.f32 1.0, %v294
    %v296 = vmul.f32 %v293, %v295
    %v297 = vadd.f32 %v293, %v296
    %vm298 = vweird.f32 %v277
    %vm299 = vweird.f32 %v293
    %vm300 = vmor %vm298, %vm299
    %v301 = vsel %vm300, %v293, %v297
    %v302 = vand.u32 2147483647, %v277
    %vm303 = vcmp.eq.f32.partialorder %v302, 8.507059e+37
    %v304 = vand.u32 %v277, 2147483648
    %v305 = vor.u32 1.1754944e-38, %v304
    %v306 = vsel %vm303, %v305, %v301
    %v307 = vmul.f32 1.0, %v306
    %v310 = vrot.slane %v307, 7
    %vm311 = vcmask 1040384
    %v312 = vsel %vm311, %v292, %v310
    %v314 = vlaneseq
    %vm315 = vcmp.ge.s32.totalorder %v314, 0
    %vm316 = vcmp.lt.s32.totalorder %v314, 256
    %vm317 = vmand %vm315, %vm316
    %318 = vst.msk [vmem:[#allocation8] sm:$0x3] %vm317, %v312
    // Predicated region
    $region26: #{tpu_custom_call.1} parent=1 // pred_check
      _
    $region27: #{tpu_custom_call.1} parent=1 // pred_check_branch
      %320 = sbr.rel (0) target = $region29
    $region28: #{tpu_custom_call.1} parent=1 // pred_region
      %322 = vsyncadd [#allocation4], 0
      %s324 = sshll.u32 [#allocation8], 4
      %s325 = int_to_ptr.vmem [resolvable:$true] %s324
      %s326 = sshll.u32 %s3, 4
      %s327 = int_to_ptr.hbm [resolvable:$true] %s326
      %329 = dma.vmem_to_hbm [thread:$0]  %s325, 32, %s327, [#allocation4]
    $region29: #{tpu_custom_call.1} parent=1 // pred_fallthru
      _
    // Predicated region
    $region30: #{tpu_custom_call.1} parent=1 // pred_check
      _
    $region31: #{tpu_custom_call.1} parent=1 // pred_check_branch
      %331 = sbr.rel (0) target = $region33
    $region32: #{tpu_custom_call.1} parent=1 // pred_region
      %333 = dma.done [#allocation4], 32
    $region33: #{tpu_custom_call.1} parent=1 // pred_fallthru
      _
    %334 = vsyncpa [#allocation3], 1
    %335 = vsyncpa [#allocation6], 1
    %336 = vsyncpa [#allocation4], 1

</llo_original>
